<compile_context>
chip_gen: v5e
topology: v5e:2x2
jax: 0.10.0
libtpu: 0.0.40
codegen_flags: <defaults>
</compile_context>

<pallas_src>
import math

import numpy as np
import jax
import jax.numpy as jnp
from jax.experimental import pallas as pl
from jax.experimental.pallas import tpu as pltpu


def _vmem():
    return pl.BlockSpec(memory_space=pltpu.MemorySpace.VMEM)


# ----------------------------------------------------------------------------
# Fused TDU kernel
# ----------------------------------------------------------------------------
def _tdu_kernel(rows_col_ref,    # VMEM (ct, 1) int32 : code_rows (column layout)
                rows_row_ref,    # VMEM (1, ct) int32 : code_rows (row layout)
                h_ref,           # VMEM (ct, d) f32   : Ht
                w_rz_ref,        # VMEM (d, 2d) f32   : [Wr^T | Wz^T]
                b_rz_ref,        # VMEM (1, 2d) f32   : [br | bz]
                wf_ref,          # VMEM (d, d)  f32   : Wf^T
                bf_ref,          # VMEM (1, d)  f32   : bf
                gi_ref,          # VMEM (E, d)  f32   : GI
                fhat_prev_ref,   # VMEM (E, d)  f32   : F_hat_t_1
                fhat_ref,        # out  (E, d)  f32   : F_hat_t
                ft_ref):         # out  (ct, d) f32   : F_t
    ct, d = h_ref.shape
    E = gi_ref.shape[0]
    h = h_ref[...]                                               # (ct, d) f32

    # One lane-dense (ct, d) @ (d, 2d) MXU pass for R and Z together.
    rz = jnp.dot(h, w_rz_ref[...],
                 preferred_element_type=jnp.float32) + b_rz_ref[...]
    r = jax.nn.sigmoid(rz[:, :d])
    z = jax.nn.sigmoid(rz[:, d:])

    # F~ needs (R*Ht + Ht) = (R + 1)*Ht as LHS -> second small matmul.
    f_pre = jnp.dot((r + 1.0) * h, wf_ref[...],
                    preferred_element_type=jnp.float32) + bf_ref[...]
    f_tilde = jnp.tanh(f_pre)

    ft = (1.0 - z) * h + z * f_tilde                             # (ct, d) f32
    ft_ref[...] = ft

    # ---- one-hot gather / scatter (no dynamic indexing, no scalar loop) ----
    rows_col = rows_col_ref[...]                                 # (ct, 1) int32
    rows_row = rows_row_ref[...]                                 # (1, ct) int32

    # Gather one-hot: onehot[i, e] = (code_rows[i] == e)
    ev_ids = jax.lax.broadcasted_iota(jnp.int32, (ct, E), 1)
    onehot = (ev_ids == rows_col).astype(jnp.float32)            # (ct, E)

    gi_rows = jnp.dot(onehot, gi_ref[...],
                      preferred_element_type=jnp.float32)        # (ct, d)
    prev_rows = jnp.dot(onehot, fhat_prev_ref[...],
                        preferred_element_type=jnp.float32)      # (ct, d)
    upd = gi_rows * prev_rows + (1.0 - gi_rows) * ft             # (ct, d)

    # Last-write-wins dedup: drop update i if the same row appears at some j>i.
    same = (rows_col == rows_row).astype(jnp.float32)            # (ct, ct)
    a_idx = jax.lax.broadcasted_iota(jnp.int32, (ct, ct), 0)     # later index a
    b_idx = jax.lax.broadcasted_iota(jnp.int32, (ct, ct), 1)     # update index b
    later_same = jnp.where(a_idx > b_idx, same, 0.0)             # (ct, ct)
    dup_later = jnp.max(later_same, axis=0, keepdims=True)       # (1, ct)
    keep = 1.0 - dup_later                                       # (1, ct)

    # Scatter one-hot (transposed layout, built directly — no in-kernel transpose):
    # onehot_T[e, i] = (code_rows[i] == e) * keep[i]
    ev_ids_t = jax.lax.broadcasted_iota(jnp.int32, (E, ct), 0)
    onehot_t = (ev_ids_t == rows_row).astype(jnp.float32) * keep  # (E, ct)

    # (E, ct) @ (ct, d): rows not referenced by code_rows come out exactly 0.
    fhat_ref[...] = jnp.dot(onehot_t, upd,
                            preferred_element_type=jnp.float32)


def tdu_forward(Ht, Ft_1, F_hat_t_1, code_rows, params):
    """Pallas implementation of TDU.forward.  Ft_1 is unused (matches PyTorch)."""
    del Ft_1  # GsFt_1 = Ht in the reference module; Ft_1 never read.
    ct, d = Ht.shape
    num_events = F_hat_t_1.shape[0]

    rows = code_rows.astype(jnp.int32)
    rows_col = rows.reshape(ct, 1)
    rows_row = rows.reshape(1, ct)

    fhat, ft = pl.pallas_call(
        _tdu_kernel,
        out_shape=(jax.ShapeDtypeStruct((num_events, d), jnp.float32),
                   jax.ShapeDtypeStruct((ct, d), jnp.float32)),
        in_specs=[_vmem(),            # code_rows (ct, 1)
                  _vmem(),            # code_rows (1, ct)
                  _vmem(),            # Ht
                  _vmem(), _vmem(),   # packed [Wr^T|Wz^T], [br|bz]
                  _vmem(), _vmem(),   # Wf^T, bf
                  _vmem(), _vmem()],  # GI, F_hat_t_1 (both (E, d))
        out_specs=(_vmem(), _vmem()),
    )(rows_col, rows_row, Ht,
      params["W_rzT"], params["b_rz"],
      params["WfT"], params["bf_row"],
      params["GI"], F_hat_t_1)

    return fhat, ft


# ----------------------------------------------------------------------------
# Parameter init (xavier-uniform, matching the PyTorch module's init scheme)
# ----------------------------------------------------------------------------
def _xavier(key, shape, gain):
    bound = gain * math.sqrt(6.0 / (shape[0] + shape[1]))
    return jax.random.uniform(key, shape, jnp.float32, -bound, bound)


def init_tdu_params(key, num_events=32, num_features=64):
    d = num_features
    ks = jax.random.split(key, 6)
    blin = 1.0 / math.sqrt(d)
    Wr = _xavier(ks[0], (d, d), 1.0)          # nn.Linear layout: (out, in)
    Wz = _xavier(ks[1], (d, d), 1.0)
    Wf = _xavier(ks[2], (d, d), 5.0 / 3.0)
    br = jax.random.uniform(ks[3], (1, d), jnp.float32, -blin, blin)
    bz = jax.random.uniform(ks[4], (1, d), jnp.float32, -blin, blin)
    bf = jax.random.uniform(ks[5], (1, d), jnp.float32, -blin, blin)
    GI = jnp.full((num_events, d), 0.5, jnp.float32)
    return dict(
        # raw f32 params (PyTorch layout) — used by the pure-JAX reference
        Wr=Wr, Wz=Wz, Wf=Wf, br=br, bz=bz, bf=bf, GI=GI,
        # kernel-side packed / pre-transposed copies (all f32)
        W_rzT=jnp.concatenate([Wr.T, Wz.T], axis=1),   # (d, 2d)
        b_rz=jnp.concatenate([br, bz], axis=1),        # (1, 2d)
        WfT=Wf.T,                                      # (d, d)
        bf_row=bf,                                     # (1, d)
        num_events=num_events, num_features=d,
    )


# ----------------------------------------------------------------------------
# Pure-JAX f32 reference (sequential scatter -> last-write-wins, like PyTorch)
# ----------------------------------------------------------------------------
def tdu_reference(Ht, F_hat_t_1, code_rows, params):
    r = jax.nn.sigmoid(Ht @ params["Wr"].T + params["br"])
    z = jax.nn.sigmoid(Ht @ params["Wz"].T + params["bz"])
    f_tilde = jnp.tanh((r * Ht + Ht) @ params["Wf"].T + params["bf"])
    ft = (1.0 - z) * Ht + z * f_tilde
    gi = params["GI"][code_rows]
    upd = gi * F_hat_t_1[code_rows] + (1.0 - gi) * ft
    fhat = jnp.zeros_like(F_hat_t_1)
    for i, row in enumerate(np.asarray(code_rows)):
        fhat = fhat.at[int(row)].set(upd[i])
    return fhat, ft


def _check(Ht, Ft_1, F_hat_t_1, code_rows, params, tol=2e-2):
    F_hat_t, F_t = tdu_forward(Ht, Ft_1, F_hat_t_1, code_rows, params)
    jax.block_until_ready((F_hat_t, F_t))
    ref_fhat, ref_ft = tdu_reference(Ht, F_hat_t_1, code_rows, params)
    err_ft = float(jnp.max(jnp.abs(F_t - ref_ft)))
    err_fh = float(jnp.max(jnp.abs(F_hat_t - ref_fhat)))
    assert err_ft < tol and err_fh < tol, (err_ft, err_fh)
    # Rows not in code_rows must be exactly zero.
    untouched = jnp.ones((F_hat_t_1.shape[0], 1), jnp.float32).at[code_rows].set(0.0)
    assert float(jnp.max(jnp.abs(F_hat_t * untouched))) == 0.0
    return F_hat_t, F_t


# ----------------------------------------------------------------------------
if __name__ == "__main__":
    key = jax.random.PRNGKey(0)
    num_events, d, ct = 32, 64, 8
    pkey, hkey, fkey = jax.random.split(key, 3)

    params = init_tdu_params(pkey, num_events=num_events, num_features=d)

    Ht = jax.random.normal(hkey, (ct, d), jnp.float32)
    Ft_1 = jnp.zeros((ct, d), jnp.float32)                 # unused by forward
    F_hat_t_1 = jax.random.normal(fkey, (num_events, d), jnp.float32)

    # Case 1: unique code_rows
    code_rows = jnp.array([3, 7, 11, 0, 19, 25, 30, 12], jnp.int32)
    F_hat_t, F_t = _check(Ht, Ft_1, F_hat_t_1, code_rows, params)
    assert F_hat_t.shape == (num_events, d) and F_t.shape == (ct, d)

    # Case 2: duplicate code_rows (last-write-wins must match PyTorch)
    code_rows_dup = jnp.array([3, 7, 3, 0, 19, 7, 30, 7], jnp.int32)
    _check(Ht, Ft_1, F_hat_t_1, code_rows_dup, params)

    print("KERNEL_OK")
</pallas_src>

<mosaic_0001>
module attributes {stable_mosaic.version = 11 : i64} {
  func.func @_tdu_kernel(%arg0: memref<8x1xi32, #tpu.memory_space<vmem>>, %arg1: memref<1x8xi32, #tpu.memory_space<vmem>>, %arg2: memref<8x64xf32, #tpu.memory_space<vmem>>, %arg3: memref<64x128xf32, #tpu.memory_space<vmem>>, %arg4: memref<1x128xf32, #tpu.memory_space<vmem>>, %arg5: memref<64x64xf32, #tpu.memory_space<vmem>>, %arg6: memref<1x64xf32, #tpu.memory_space<vmem>>, %arg7: memref<32x64xf32, #tpu.memory_space<vmem>>, %arg8: memref<32x64xf32, #tpu.memory_space<vmem>>, %arg9: memref<32x64xf32, #tpu.memory_space<vmem>>, %arg10: memref<8x64xf32, #tpu.memory_space<vmem>>) attributes {dimension_semantics = [], scalar_prefetch = 0 : i64, scratch_operands = 0 : i64, tpu.core_type = #tpu.core_type<tc>} {
    %c0 = arith.constant 0 : index
    %c0_0 = arith.constant 0 : index
    %0 = vector.load %arg2[%c0, %c0_0] : memref<8x64xf32, #tpu.memory_space<vmem>>, vector<8x64xf32>
    %c0_1 = arith.constant 0 : index
    %c0_2 = arith.constant 0 : index
    %1 = vector.load %arg3[%c0_1, %c0_2] : memref<64x128xf32, #tpu.memory_space<vmem>>, vector<64x128xf32>
    %cst = arith.constant dense<0.000000e+00> : vector<8x128xf32>
    %2 = tpu.matmul %0, %1, %cst {dimension_numbers = #tpu.dot_dimension_numbers<[1], [0], [0], [1], [0, 0, 1, 1], [], []>} : vector<8x64xf32>, vector<64x128xf32>, vector<8x128xf32> -> vector<8x128xf32>
    %c0_3 = arith.constant 0 : index
    %c0_4 = arith.constant 0 : index
    %3 = vector.load %arg4[%c0_3, %c0_4] : memref<1x128xf32, #tpu.memory_space<vmem>>, vector<1x128xf32>
    %4 = vector.broadcast %3 : vector<1x128xf32> to vector<8x128xf32>
    %5 = arith.addf %2, %4 : vector<8x128xf32>
    %6 = vector.extract_strided_slice %5 {offsets = [0, 0], sizes = [8, 64], strides = [1, 1]} : vector<8x128xf32> to vector<8x64xf32>
    %7 = arith.negf %6 : vector<8x64xf32>
    %8 = math.exp %7 : vector<8x64xf32>
    %cst_5 = arith.constant 1.000000e+00 : f32
    %9 = vector.broadcast %cst_5 : f32 to vector<8x64xf32>
    %10 = arith.addf %9, %8 : vector<8x64xf32>
    %11 = arith.divf %9, %10 : vector<8x64xf32>
    %12 = vector.extract_strided_slice %5 {offsets = [0, 64], sizes = [8, 64], strides = [1, 1]} : vector<8x128xf32> to vector<8x64xf32>
    %13 = arith.negf %12 : vector<8x64xf32>
    %14 = math.exp %13 : vector<8x64xf32>
    %cst_6 = arith.constant 1.000000e+00 : f32
    %15 = vector.broadcast %cst_6 : f32 to vector<8x64xf32>
    %16 = arith.addf %15, %14 : vector<8x64xf32>
    %17 = arith.divf %15, %16 : vector<8x64xf32>
    %cst_7 = arith.constant 1.000000e+00 : f32
    %18 = vector.broadcast %cst_7 : f32 to vector<8x64xf32>
    %19 = arith.addf %11, %18 : vector<8x64xf32>
    %20 = arith.mulf %19, %0 : vector<8x64xf32>
    %c0_8 = arith.constant 0 : index
    %c0_9 = arith.constant 0 : index
    %21 = vector.load %arg5[%c0_8, %c0_9] : memref<64x64xf32, #tpu.memory_space<vmem>>, vector<64x64xf32>
    %cst_10 = arith.constant dense<0.000000e+00> : vector<8x64xf32>
    %22 = tpu.matmul %20, %21, %cst_10 {dimension_numbers = #tpu.dot_dimension_numbers<[1], [0], [0], [1], [0, 0, 1, 1], [], []>} : vector<8x64xf32>, vector<64x64xf32>, vector<8x64xf32> -> vector<8x64xf32>
    %c0_11 = arith.constant 0 : index
    %c0_12 = arith.constant 0 : index
    %23 = vector.load %arg6[%c0_11, %c0_12] : memref<1x64xf32, #tpu.memory_space<vmem>>, vector<1x64xf32>
    %24 = vector.broadcast %23 : vector<1x64xf32> to vector<8x64xf32>
    %25 = arith.addf %22, %24 : vector<8x64xf32>
    %26 = math.tanh %25 : vector<8x64xf32>
    %cst_13 = arith.constant 1.000000e+00 : f32
    %27 = vector.broadcast %cst_13 : f32 to vector<8x64xf32>
    %28 = arith.subf %27, %17 : vector<8x64xf32>
    %29 = arith.mulf %28, %0 : vector<8x64xf32>
    %30 = arith.mulf %17, %26 : vector<8x64xf32>
    %31 = arith.addf %29, %30 : vector<8x64xf32>
    %c0_14 = arith.constant 0 : index
    %c0_15 = arith.constant 0 : index
    %32 = vector.load %arg10[%c0_14, %c0_15] : memref<8x64xf32, #tpu.memory_space<vmem>>, vector<8x64xf32>
    tpu.vector_store %arg10[%c0_14, %c0_15], %31 {strides = array<i32>} : memref<8x64xf32, #tpu.memory_space<vmem>>, vector<8x64xf32>,
    %c0_16 = arith.constant 0 : index
    %c0_17 = arith.constant 0 : index
    %33 = vector.load %arg0[%c0_16, %c0_17] : memref<8x1xi32, #tpu.memory_space<vmem>>, vector<8x1xi32>
    %c0_18 = arith.constant 0 : index
    %c0_19 = arith.constant 0 : index
    %34 = vector.load %arg1[%c0_18, %c0_19] : memref<1x8xi32, #tpu.memory_space<vmem>>, vector<1x8xi32>
    %35 = tpu.iota {dimensions = array<i32: 1>} : vector<8x32xi32>
    %36 = vector.broadcast %33 : vector<8x1xi32> to vector<8x32xi32>
    %37 = arith.cmpi eq, %35, %36 : vector<8x32xi32>
    %38 = arith.extui %37 : vector<8x32xi1> to vector<8x32xi32>
    %39 = arith.sitofp %38 : vector<8x32xi32> to vector<8x32xf32>
    %c0_20 = arith.constant 0 : index
    %c0_21 = arith.constant 0 : index
    %40 = vector.load %arg7[%c0_20, %c0_21] : memref<32x64xf32, #tpu.memory_space<vmem>>, vector<32x64xf32>
    %cst_22 = arith.constant dense<0.000000e+00> : vector<8x64xf32>
    %41 = tpu.matmul %39, %40, %cst_22 {dimension_numbers = #tpu.dot_dimension_numbers<[1], [0], [0], [1], [0, 0, 1, 1], [], []>} : vector<8x32xf32>, vector<32x64xf32>, vector<8x64xf32> -> vector<8x64xf32>
    %c0_23 = arith.constant 0 : index
    %c0_24 = arith.constant 0 : index
    %42 = vector.load %arg8[%c0_23, %c0_24] : memref<32x64xf32, #tpu.memory_space<vmem>>, vector<32x64xf32>
    %cst_25 = arith.constant dense<0.000000e+00> : vector<8x64xf32>
    %43 = tpu.matmul %39, %42, %cst_25 {dimension_numbers = #tpu.dot_dimension_numbers<[1], [0], [0], [1], [0, 0, 1, 1], [], []>} : vector<8x32xf32>, vector<32x64xf32>, vector<8x64xf32> -> vector<8x64xf32>
    %44 = arith.mulf %41, %43 : vector<8x64xf32>
    %cst_26 = arith.constant 1.000000e+00 : f32
    %45 = vector.broadcast %cst_26 : f32 to vector<8x64xf32>
    %46 = arith.subf %45, %41 : vector<8x64xf32>
    %47 = arith.mulf %46, %31 : vector<8x64xf32>
    %48 = arith.addf %44, %47 : vector<8x64xf32>
    %49 = vector.broadcast %33 : vector<8x1xi32> to vector<8x8xi32>
    %50 = vector.broadcast %34 : vector<1x8xi32> to vector<8x8xi32>
    %51 = arith.cmpi eq, %49, %50 : vector<8x8xi32>
    %52 = arith.extui %51 : vector<8x8xi1> to vector<8x8xi32>
    %53 = arith.sitofp %52 : vector<8x8xi32> to vector<8x8xf32>
    %54 = tpu.iota {dimensions = array<i32: 0>} : vector<8x8xi32>
    %55 = tpu.iota {dimensions = array<i32: 1>} : vector<8x8xi32>
    %56 = arith.cmpi sgt, %54, %55 : vector<8x8xi32>
    %cst_27 = arith.constant 0.000000e+00 : f32
    %57 = vector.broadcast %cst_27 : f32 to vector<8x8xf32>
    %58 = arith.select %56, %53, %57 : vector<8x8xi1>, vector<8x8xf32>
    %cst_28 = arith.constant dense<0xFF800000> : vector<8xf32>
    %59 = vector.multi_reduction <maximumf>, %58, %cst_28 [0] : vector<8x8xf32> to vector<8xf32>
    %60 = vector.shape_cast %59 : vector<8xf32> to vector<1x8xf32>
    %cst_29 = arith.constant 1.000000e+00 : f32
    %61 = vector.broadcast %cst_29 : f32 to vector<1x8xf32>
    %62 = arith.subf %61, %60 : vector<1x8xf32>
    %63 = tpu.iota {dimensions = array<i32: 0>} : vector<32x8xi32>
    %64 = vector.broadcast %34 : vector<1x8xi32> to vector<32x8xi32>
    %65 = arith.cmpi eq, %63, %64 : vector<32x8xi32>
    %66 = arith.extui %65 : vector<32x8xi1> to vector<32x8xi32>
    %67 = arith.sitofp %66 : vector<32x8xi32> to vector<32x8xf32>
    %68 = vector.broadcast %62 : vector<1x8xf32> to vector<32x8xf32>
    %69 = arith.mulf %67, %68 : vector<32x8xf32>
    %cst_30 = arith.constant dense<0.000000e+00> : vector<32x64xf32>
    %70 = tpu.matmul %69, %48, %cst_30 {dimension_numbers = #tpu.dot_dimension_numbers<[1], [0], [0], [1], [0, 0, 1, 1], [], []>} : vector<32x8xf32>, vector<8x64xf32>, vector<32x64xf32> -> vector<32x64xf32>
    %c0_31 = arith.constant 0 : index
    %c0_32 = arith.constant 0 : index
    %71 = vector.load %arg9[%c0_31, %c0_32] : memref<32x64xf32, #tpu.memory_space<vmem>>, vector<32x64xf32>
    tpu.vector_store %arg9[%c0_31, %c0_32], %70 {strides = array<i32>} : memref<32x64xf32, #tpu.memory_space<vmem>>, vector<32x64xf32>,
    return
  }
}

</mosaic_0001>

<llo_original>
// kernel: tpu_custom_call.1
$region0: #{tpu_custom_call.1}
  #allocation0 [shape = 'u32[]', space=smem, size = 0x4, offset = 0x4, fixed_abs, tag = 'smem constant byte address 0x4 - core index']
  #allocation1 [shape = 'u32[72,128]{1,0:T(1,128)}', space=vmem, size = 0x9000, scoped, tag = 'internal scratch']
  %s0 = inlined_call_operand.vmem [shape: s32[8,1], index: 0, kind: input, shape index: {}]
  %s1 = inlined_call_operand.vmem [shape: s32[1,8], index: 1, kind: input, shape index: {}]
  %s2 = inlined_call_operand.vmem [shape: f32[8,64], index: 2, kind: input, shape index: {}]
  %s3 = inlined_call_operand.hbm [shape: f32[64,128], index: 3, kind: input, shape index: {}]
  %s4 = inlined_call_operand.vmem [shape: f32[1,128], index: 4, kind: input, shape index: {}]
  %s5 = inlined_call_operand.hbm [shape: f32[64,64], index: 5, kind: input, shape index: {}]
  %s6 = inlined_call_operand.vmem [shape: f32[1,64], index: 6, kind: input, shape index: {}]
  %s7 = inlined_call_operand.hbm [shape: f32[32,64], index: 7, kind: input, shape index: {}]
  %s8 = inlined_call_operand.hbm [shape: f32[32,64], index: 8, kind: input, shape index: {}]
  %s9 = inlined_call_operand.hbm [shape: f32[32,64], index: 9, kind: output, shape index: {0}]
  %s10 = inlined_call_operand.hbm [shape: f32[8,64], index: 10, kind: output, shape index: {1}]
  %11 = xla_tuple %s9, %s10
  %s12 = sld [smem:[#allocation0]]
  $region70: #{tpu_custom_call.1} parent=0
    _
  %s14 = ssub.s32 1, %s12
  %s15 = scalar_select 0, %s14, %s12
  $region1: #{tpu_custom_call.1} parent=0
    #allocation2 [shape = 'u8[32768]{0}', space=vmem, size = 0x8000, scoped, tag = 'input window, operand 3, single buffered']
    #allocation3 [shape = 's32[1]{0}', space=sflag, size = 0x4, scoped, tag = 'scoped memory for tpu_custom_call.1']
    #allocation4 [shape = 's32[1]{0}', space=sflag, size = 0x4, scoped, tag = 'scoped memory for tpu_custom_call.1']
    #allocation5 [shape = 'u8[32768]{0}', space=vmem, size = 0x8000, scoped, tag = 'input window, operand 5, single buffered']
    #allocation6 [shape = 's32[1]{0}', space=sflag, size = 0x4, scoped, tag = 'scoped memory for tpu_custom_call.1']
    #allocation7 [shape = 'u8[16384]{0}', space=vmem, size = 0x4000, scoped, tag = 'input window, operand 7, single buffered']
    #allocation8 [shape = 'u8[16384]{0}', space=vmem, size = 0x4000, scoped, tag = 'input window, operand 8, single buffered']
    #allocation9 [shape = 's32[1]{0}', space=sflag, size = 0x4, scoped, tag = 'scoped memory for tpu_custom_call.1']
    #allocation10 [shape = 'u8[16384]{0}', space=vmem, size = 0x4000, scoped, tag = 'output window, operand 0, single buffered']
    #allocation11 [shape = 'u8[4096]{0}', space=vmem, size = 0x1000, scoped, tag = 'output window, operand 1, single buffered']
    #allocation12 [shape = 's32[1]{0}', space=sflag, size = 0x4, scoped, tag = 'scoped memory for tpu_custom_call.1']
    %16 = vsyncpa [#allocation3], 0
    %17 = vsyncpa [#allocation6], 0
    %18 = vsyncpa [#allocation9], 0
    %19 = vsyncpa [#allocation4], 0
    %20 = vsyncpa [#allocation12], 0
    // Predicated region
    $region2: #{tpu_custom_call.1} parent=1 // pred_check
      _
    $region3: #{tpu_custom_call.1} parent=1 // pred_check_branch
      %22 = sbr.rel (0) target = $region5
    $region4: #{tpu_custom_call.1} parent=1 // pred_region
      _
    $region5: #{tpu_custom_call.1} parent=1 // pred_fallthru
      _
    // Predicated region
    $region6: #{tpu_custom_call.1} parent=1 // pred_check
      _
    $region7: #{tpu_custom_call.1} parent=1 // pred_check_branch
      %24 = sbr.rel (0) target = $region9
    $region8: #{tpu_custom_call.1} parent=1 // pred_region
      _
    $region9: #{tpu_custom_call.1} parent=1 // pred_fallthru
      _
    // Predicated region
    $region10: #{tpu_custom_call.1} parent=1 // pred_check
      _
    $region11: #{tpu_custom_call.1} parent=1 // pred_check_branch
      %26 = sbr.rel (0) target = $region13
    $region12: #{tpu_custom_call.1} parent=1 // pred_region
      _
    $region13: #{tpu_custom_call.1} parent=1 // pred_fallthru
      _
    // Predicated region
    $region14: #{tpu_custom_call.1} parent=1 // pred_check
      _
    $region15: #{tpu_custom_call.1} parent=1 // pred_check_branch
      %28 = sbr.rel (0) target = $region17
    $region16: #{tpu_custom_call.1} parent=1 // pred_region
      %30 = vsyncadd [#allocation3], 0
      %s31 = sshll.u32 %s3, 4
      %s32 = int_to_ptr.hbm [resolvable:$true] %s31
      %s33 = sshll.u32 [#allocation2], 4
      %s34 = int_to_ptr.vmem [resolvable:$true] %s33
      %39 = dma.hbm_to_vmem [thread:$0]  %s32, 1024, %s34, [#allocation3], 128, 128, 8
    $region17: #{tpu_custom_call.1} parent=1 // pred_fallthru
      _
    // Predicated region
    $region18: #{tpu_custom_call.1} parent=1 // pred_check
      _
    $region19: #{tpu_custom_call.1} parent=1 // pred_check_branch
      %41 = sbr.rel (0) target = $region21
    $region20: #{tpu_custom_call.1} parent=1 // pred_region
      _
    $region21: #{tpu_custom_call.1} parent=1 // pred_fallthru
      _
    // Predicated region
    $region22: #{tpu_custom_call.1} parent=1 // pred_check
      _
    $region23: #{tpu_custom_call.1} parent=1 // pred_check_branch
      %43 = sbr.rel (0) target = $region25
    $region24: #{tpu_custom_call.1} parent=1 // pred_region
      %45 = vsyncadd [#allocation6], 0
      %s46 = sshll.u32 %s5, 4
      %s47 = int_to_ptr.hbm [resolvable:$true] %s46
      %s48 = sshll.u32 [#allocation5], 4
      %s49 = int_to_ptr.vmem [resolvable:$true] %s48
      %54 = dma.hbm_to_vmem [thread:$0]  %s47, 1024, %s49, [#allocation6], 128, 128, 8
    $region25: #{tpu_custom_call.1} parent=1 // pred_fallthru
      _
    // Predicated region
    $region26: #{tpu_custom_call.1} parent=1 // pred_check
      _
    $region27: #{tpu_custom_call.1} parent=1 // pred_check_branch
      %56 = sbr.rel (0) target = $region29
    $region28: #{tpu_custom_call.1} parent=1 // pred_region
      _
    $region29: #{tpu_custom_call.1} parent=1 // pred_fallthru
      _
    // Predicated region
    $region30: #{tpu_custom_call.1} parent=1 // pred_check
      _
    $region31: #{tpu_custom_call.1} parent=1 // pred_check_branch
      %58 = sbr.rel (0) target = $region33
    $region32: #{tpu_custom_call.1} parent=1 // pred_region
      %60 = vsyncadd [#allocation6], 0
      %s61 = sshll.u32 %s7, 4
      %s62 = int_to_ptr.hbm [resolvable:$true] %s61
      %s63 = sshll.u32 [#allocation7], 4
      %s64 = int_to_ptr.vmem [resolvable:$true] %s63
      %69 = dma.hbm_to_vmem [thread:$0]  %s62, 512, %s64, [#allocation6], 128, 128, 8
    $region33: #{tpu_custom_call.1} parent=1 // pred_fallthru
      _
    // Predicated region
    $region34: #{tpu_custom_call.1} parent=1 // pred_check
      _
    $region35: #{tpu_custom_call.1} parent=1 // pred_check_branch
      %71 = sbr.rel (0) target = $region37
    $region36: #{tpu_custom_call.1} parent=1 // pred_region
      %73 = vsyncadd [#allocation9], 0
      %s74 = sshll.u32 %s8, 4
      %s75 = int_to_ptr.hbm [resolvable:$true] %s74
      %s76 = sshll.u32 [#allocation8], 4
      %s77 = int_to_ptr.vmem [resolvable:$true] %s76
      %82 = dma.hbm_to_vmem [thread:$0]  %s75, 512, %s77, [#allocation9], 128, 128, 8
    $region37: #{tpu_custom_call.1} parent=1 // pred_fallthru
      _
    // Predicated region
    $region38: #{tpu_custom_call.1} parent=1 // pred_check
      _
    $region39: #{tpu_custom_call.1} parent=1 // pred_check_branch
      %84 = sbr.rel (0) target = $region41
    $region40: #{tpu_custom_call.1} parent=1 // pred_region
      %86 = dma.done [#allocation3], 1024
    $region41: #{tpu_custom_call.1} parent=1 // pred_fallthru
      _
    // Predicated region
    $region42: #{tpu_custom_call.1} parent=1 // pred_check
      _
    $region43: #{tpu_custom_call.1} parent=1 // pred_check_branch
      %88 = sbr.rel (0) target = $region45
    $region44: #{tpu_custom_call.1} parent=1 // pred_region
      %90 = dma.done [#allocation6], 1024
    $region45: #{tpu_custom_call.1} parent=1 // pred_fallthru
      _
    // Predicated region
    $region46: #{tpu_custom_call.1} parent=1 // pred_check
      _
    $region47: #{tpu_custom_call.1} parent=1 // pred_check_branch
      %92 = sbr.rel (0) target = $region49
    $region48: #{tpu_custom_call.1} parent=1 // pred_region
      %94 = dma.done [#allocation6], 512
    $region49: #{tpu_custom_call.1} parent=1 // pred_fallthru
      _
    // Predicated region
    $region50: #{tpu_custom_call.1} parent=1 // pred_check
      _
    $region51: #{tpu_custom_call.1} parent=1 // pred_check_branch
      %96 = sbr.rel (0) target = $region53
    $region52: #{tpu_custom_call.1} parent=1 // pred_region
      %98 = dma.done [#allocation9], 512
    $region53: #{tpu_custom_call.1} parent=1 // pred_fallthru
      _
    %v99 = vld [vmem:[%s2] sm:$0xff]
    %v100 = vld [vmem:[#allocation2] sm:$0xff]
    %v101 = vld [vmem:[#allocation2 + $0x8] sm:$0xff]
    %v102 = vld [vmem:[#allocation2 + $0x10] sm:$0xff]
    %v103 = vld [vmem:[#allocation2 + $0x18] sm:$0xff]
    %v104 = vld [vmem:[#allocation2 + $0x20] sm:$0xff]
    %v105 = vld [vmem:[#allocation2 + $0x28] sm:$0xff]
    %v106 = vld [vmem:[#allocation2 + $0x30] sm:$0xff]
    %v107 = vld [vmem:[#allocation2 + $0x38] sm:$0xff]
    %v108 = vld [vmem:[%s4] sm:$0x1]
    %v110 = vperm.slane %v108, 0
    %vm112 = vcmask 523264
    %v114 = vsel %vm112, %v99, 0
    %116 = vmatpush.msra.mxu0 0.0
    %117 = vmatpush.msra.mxu0 0.0
    %118 = vmatpush.msra.mxu0 0.0
    %119 = vmatpush.msra.mxu0 0.0
    %120 = vmatpush.msra.mxu0 0.0
    %121 = vmatpush.msra.mxu0 0.0
    %122 = vmatpush.msra.mxu0 0.0
    %123 = vmatpush.msra.mxu0 0.0
    %124 = vmatpush.msra.mxu0 %v107
    %125 = vmatpush.msra.mxu0 %v106
    %126 = vmatpush.msra.mxu0 %v105
    %127 = vmatpush.msra.mxu0 %v104
    %128 = vmatpush.msra.mxu0 %v103
    %129 = vmatpush.msra.mxu0 %v102
    %130 = vmatpush.msra.mxu0 %v101
    %131 = vmatpush.msra.mxu0 %v100
    %132 = vmatmul.f32.gmra.mxu0 %v114
    %v133 = vpop.f32.mrf.mxu0
    %v134 = vadd.f32 %v110, %v133
    %135 = vdwg.mxu0
    %v136 = vxor.u32 %v134, 2147483648
    %v137 = vmul.f32 %v136, 1.442695
    %v138 = vpow.pop %v137
    %v139 = vadd.f32 %v138, 1.0
    %v140 = vrcp.pop %v139
    %v141 = vmul.f32 %v139, %v140
    %v142 = vsub.f32 1.0, %v141
    %v143 = vmul.f32 %v140, %v142
    %v144 = vadd.f32 %v140, %v143
    %vm145 = vweird.f32 %v139
    %vm146 = vweird.f32 %v140
    %vm147 = vmor %vm145, %vm146
    %v148 = vsel %vm147, %v140, %v144
    %v149 = vand.u32 2147483647, %v139
    %vm150 = vcmp.eq.f32.partialorder %v149, 8.507059e+37
    %v151 = vand.u32 %v139, 2147483648
    %v152 = vor.u32 1.1754944e-38, %v151
    %v153 = vsel %vm150, %v152, %v148
    %v154 = vmul.f32 1.0, %v153
    %v155 = vadd.f32 %v154, 1.0
    %v156 = vmul.f32 %v155, %v99
    %v157 = vld [vmem:[#allocation5] sm:$0xff]
    %v158 = vld [vmem:[#allocation5 + $0x8] sm:$0xff]
    %v159 = vld [vmem:[#allocation5 + $0x10] sm:$0xff]
    %v160 = vld [vmem:[#allocation5 + $0x18] sm:$0xff]
    %v161 = vld [vmem:[#allocation5 + $0x20] sm:$0xff]
    %v162 = vld [vmem:[#allocation5 + $0x28] sm:$0xff]
    %v163 = vld [vmem:[#allocation5 + $0x30] sm:$0xff]
    %v164 = vld [vmem:[#allocation5 + $0x38] sm:$0xff]
    %v165 = vld [vmem:[%s6] sm:$0x1]
    %v167 = vperm.slane %v165, 0
    %v170 = vsel %vm112, %v156, 0
    %172 = vmatpush.msra.mxu0 0.0
    %173 = vmatpush.msra.mxu0 0.0
    %174 = vmatpush.msra.mxu0 0.0
    %175 = vmatpush.msra.mxu0 0.0
    %176 = vmatpush.msra.mxu0 0.0
    %177 = vmatpush.msra.mxu0 0.0
    %178 = vmatpush.msra.mxu0 0.0
    %179 = vmatpush.msra.mxu0 0.0
    %180 = vmatpush.msra.mxu0 %v164
    %181 = vmatpush.msra.mxu0 %v163
    %182 = vmatpush.msra.mxu0 %v162
    %183 = vmatpush.msra.mxu0 %v161
    %184 = vmatpush.msra.mxu0 %v160
    %185 = vmatpush.msra.mxu0 %v159
    %186 = vmatpush.msra.mxu0 %v158
    %187 = vmatpush.msra.mxu0 %v157
    %188 = vmatmul.f32.gmra.mxu0 %v170
    %v189 = vpop.f32.mrf.mxu0
    %v190 = vadd.f32 %v167, %v189
    %191 = vdwg.mxu0
    %v192 = vtanh.pop %v190
    %v193 = vsub.f32 1.0, %v154
    %194 = vrot.lane.b32.xlu0 %v99, 64
    %v195 = vpop.permute.xlu0 %194
    %v197 = vmul.f32 %v193, %v195
    %199 = vrot.lane.b32.xlu0 %v192, 64
    %v200 = vpop.permute.xlu0 %199
    %v202 = vmul.f32 %v154, %v200
    %v203 = vadd.f32 %v197, %v202
    %205 = vrot.lane.b32.xlu0 %v203, 64
    %v206 = vpop.permute.xlu0 %205
    %208 = vst.msk [vmem:[#allocation11] sm:$0xff] %vm112, %v206
    %v209 = vld [vmem:[%s0] sm:$0xff]
    %v210 = vld [vmem:[%s1] sm:$0x1]
    %v211 = vlaneseq
    %v212 = vand.u32 %v211, 127
    %213 = vset.pattern.permute.xlu0 0
    %214 = vperm.xlu0 %213, %v209
    %v215 = vpop.permute.xlu0 %214
    %vm216 = vcmp.eq.s32.totalorder %v212, %v215
    %v217 = vsel %vm216, 1, 0
    %v218 = vcvt.s32.f32 %v217
    %v219 = vld [vmem:[#allocation7] sm:$0xff]
    %v220 = vld [vmem:[#allocation7 + $0x8] sm:$0xff]
    %v221 = vld [vmem:[#allocation7 + $0x10] sm:$0xff]
    %v222 = vld [vmem:[#allocation7 + $0x18] sm:$0xff]
    %vm223 = vcmask 261120
    %v225 = vsel %vm223, %v218, 0
    %227 = vmatpush.msra.mxu0 0.0
    %228 = vmatpush.msra.mxu0 0.0
    %229 = vmatpush.msra.mxu0 0.0
    %230 = vmatpush.msra.mxu0 0.0
    %231 = vmatpush.msra.mxu0 0.0
    %232 = vmatpush.msra.mxu0 0.0
    %233 = vmatpush.msra.mxu0 0.0
    %234 = vmatpush.msra.mxu0 0.0
    %235 = vmatpush.msra.mxu0 0.0
    %236 = vmatpush.msra.mxu0 0.0
    %237 = vmatpush.msra.mxu0 0.0
    %238 = vmatpush.msra.mxu0 0.0
    %239 = vmatpush.msra.mxu0 %v222
    %240 = vmatpush.msra.mxu0 %v221
    %241 = vmatpush.msra.mxu0 %v220
    %242 = vmatpush.msra.mxu0 %v219
    %243 = vmatmul.f32.gmra.mxu0 %v225
    %v244 = vpop.f32.mrf.mxu0
    %v245 = vadd.f32 0.0, %v244
    %246 = vdwg.mxu0
    %v247 = vld [vmem:[#allocation8] sm:$0xff]
    %v248 = vld [vmem:[#allocation8 + $0x8] sm:$0xff]
    %v249 = vld [vmem:[#allocation8 + $0x10] sm:$0xff]
    %v250 = vld [vmem:[#allocation8 + $0x18] sm:$0xff]
    %251 = vmatpush.msra.mxu0 0.0
    %252 = vmatpush.msra.mxu0 0.0
    %253 = vmatpush.msra.mxu0 0.0
    %254 = vmatpush.msra.mxu0 0.0
    %255 = vmatpush.msra.mxu0 0.0
    %256 = vmatpush.msra.mxu0 0.0
    %257 = vmatpush.msra.mxu0 0.0
    %258 = vmatpush.msra.mxu0 0.0
    %259 = vmatpush.msra.mxu0 0.0
    %260 = vmatpush.msra.mxu0 0.0
    %261 = vmatpush.msra.mxu0 0.0
    %262 = vmatpush.msra.mxu0 0.0
    %263 = vmatpush.msra.mxu0 %v250
    %264 = vmatpush.msra.mxu0 %v249
    %265 = vmatpush.msra.mxu0 %v248
    %266 = vmatpush.msra.mxu0 %v247
    %267 = vmatmul.f32.gmra.mxu0 %v225
    %v268 = vpop.f32.mrf.mxu0
    %v269 = vadd.f32 0.0, %v268
    %270 = vdwg.mxu0
    %v271 = vmul.f32 %v245, %v269
    %v272 = vsub.f32 1.0, %v245
    %v273 = vmul.f32 %v272, %v206
    %v274 = vadd.f32 %v271, %v273
    %v275 = vperm.slane %v210, 0
    %vm276 = vcmp.eq.s32.totalorder %v215, %v275
    %v277 = vsel %vm276, 1, 0
    %v278 = vcvt.s32.f32 %v277
    %v279 = vlaneseq
    %v280 = vshrl.u32 %v279, 7
    %vm281 = vcmp.gt.s32.totalorder %v280, %v212
    %v282 = vsel %vm281, %v278, 0.0
    %vm283 = vcmask 64512
    %v284 = vsel %vm283, %v282, -inf
    %v285 = vrot.slane %v284, 4
    %v286 = vmax.f32 %v284, %v285
    %v287 = vrot.slane %v286, 2
    %v288 = vmax.f32 %v286, %v287
    %v289 = vrot.slane %v288, 1
    %v290 = vmax.f32 %v288, %v289
    %v291 = vsub.f32 1.0, %v290
    %v292 = vadd.s32 %v280, 8
    %v293 = vadd.s32 %v280, 16
    %v294 = vadd.s32 %v280, 24
    %vm295 = vcmp.eq.s32.totalorder %v280, %v275
    %vm296 = vcmp.eq.s32.totalorder %v292, %v275
    %vm297 = vcmp.eq.s32.totalorder %v293, %v275
    %vm298 = vcmp.eq.s32.totalorder %v294, %v275
    %v299 = vsel %vm295, 1, 0
    %v300 = vsel %vm296, 1, 0
    %v301 = vsel %vm297, 1, 0
    %v302 = vsel %vm298, 1, 0
    %v303 = vcvt.s32.f32 %v299
    %v304 = vcvt.s32.f32 %v300
    %v305 = vcvt.s32.f32 %v301
    %v306 = vcvt.s32.f32 %v302
    %v307 = vmul.f32 %v303, %v291
    %v308 = vmul.f32 %v304, %v291
    %v309 = vmul.f32 %v305, %v291
    %v310 = vmul.f32 %v306, %v291
    %v312 = vsel %vm283, %v307, 0
    %v315 = vsel %vm283, %v308, 0
    %v318 = vsel %vm283, %v309, 0
    %v321 = vsel %vm283, %v310, 0
    %323 = vmatpush.msra.mxu0 0.0
    %324 = vmatpush.msra.mxu0 0.0
    %325 = vmatpush.msra.mxu0 0.0
    %326 = vmatpush.msra.mxu0 0.0
    %327 = vmatpush.msra.mxu0 0.0
    %328 = vmatpush.msra.mxu0 0.0
    %329 = vmatpush.msra.mxu0 0.0
    %330 = vmatpush.msra.mxu0 0.0
    %331 = vmatpush.msra.mxu0 0.0
    %332 = vmatpush.msra.mxu0 0.0
    %333 = vmatpush.msra.mxu0 0.0
    %334 = vmatpush.msra.mxu0 0.0
    %335 = vmatpush.msra.mxu0 0.0
    %336 = vmatpush.msra.mxu0 0.0
    %337 = vmatpush.msra.mxu0 0.0
    %338 = vmatpush.msra.mxu0 %v274
    %339 = vmatmul.f32.gmra.mxu0 %v312
    %v340 = vpop.f32.mrf.mxu0
    %v341 = vadd.f32 0.0, %v340
    %342 = vmatmul.f32.gmra.mxu0 %v315
    %v343 = vpop.f32.mrf.mxu0
    %v344 = vadd.f32 0.0, %v343
    %345 = vmatmul.f32.gmra.mxu0 %v318
    %v346 = vpop.f32.mrf.mxu0
    %v347 = vadd.f32 0.0, %v346
    %348 = vmatmul.f32.gmra.mxu0 %v321
    %v349 = vpop.f32.mrf.mxu0
    %v350 = vadd.f32 0.0, %v349
    %351 = vdwg.mxu0
    %352 = vst.msk [vmem:[#allocation10] sm:$0xff] %vm112, %v341
    %353 = vst.msk [vmem:[#allocation10 + $0x8] sm:$0xff] %vm112, %v344
    %354 = vst.msk [vmem:[#allocation10 + $0x10] sm:$0xff] %vm112, %v347
    %355 = vst.msk [vmem:[#allocation10 + $0x18] sm:$0xff] %vm112, %v350
    // Predicated region
    $region54: #{tpu_custom_call.1} parent=1 // pred_check
      _
    $region55: #{tpu_custom_call.1} parent=1 // pred_check_branch
      %357 = sbr.rel (0) target = $region57
    $region56: #{tpu_custom_call.1} parent=1 // pred_region
      %359 = vsyncadd [#allocation4], 0
      %s360 = sshll.u32 [#allocation10], 4
      %s361 = int_to_ptr.vmem [resolvable:$true] %s360
      %s362 = sshll.u32 %s9, 4
      %s363 = int_to_ptr.hbm [resolvable:$true] %s362
      %368 = dma.vmem_to_hbm [thread:$0]  %s361, 512, %s363, [#allocation4], 128, 128, 8
    $region57: #{tpu_custom_call.1} parent=1 // pred_fallthru
      _
    // Predicated region
    $region58: #{tpu_custom_call.1} parent=1 // pred_check
      _
    $region59: #{tpu_custom_call.1} parent=1 // pred_check_branch
      %370 = sbr.rel (0) target = $region61
    $region60: #{tpu_custom_call.1} parent=1 // pred_region
      %372 = vsyncadd [#allocation12], 0
      %s374 = sshll.u32 [#allocation11], 4
      %s375 = int_to_ptr.vmem [resolvable:$true] %s374
      %s376 = sshll.u32 %s10, 4
      %s377 = int_to_ptr.hbm [resolvable:$true] %s376
      %379 = dma.vmem_to_hbm [thread:$0]  %s375, 128, %s377, [#allocation12]
    $region61: #{tpu_custom_call.1} parent=1 // pred_fallthru
      _
    // Predicated region
    $region62: #{tpu_custom_call.1} parent=1 // pred_check
      _
    $region63: #{tpu_custom_call.1} parent=1 // pred_check_branch
      %381 = sbr.rel (0) target = $region65
    $region64: #{tpu_custom_call.1} parent=1 // pred_region
      %383 = dma.done [#allocation4], 512
    $region65: #{tpu_custom_call.1} parent=1 // pred_fallthru
      _
    // Predicated region
    $region66: #{tpu_custom_call.1} parent=1 // pred_check
      _
    $region67: #{tpu_custom_call.1} parent=1 // pred_check_branch
      %385 = sbr.rel (0) target = $region69
    $region68: #{tpu_custom_call.1} parent=1 // pred_region
      %387 = dma.done [#allocation12], 128
    $region69: #{tpu_custom_call.1} parent=1 // pred_fallthru
      _
    %388 = vsyncpa [#allocation3], 1
    %389 = vsyncpa [#allocation6], 1
    %390 = vsyncpa [#allocation9], 1
    %391 = vsyncpa [#allocation4], 1
    %392 = vsyncpa [#allocation12], 1

</llo_original>
